<compile_context>
chip_gen: v7x
topology: tpu7x:2x2x1
jax: 0.10.0
libtpu: 0.0.40
codegen_flags: <defaults>
</compile_context>

<pallas_src>
import numpy as np
import jax
import jax.numpy as jnp
from jax.experimental import pallas as pl
from jax.experimental.pallas import tpu as pltpu


# ----------------------------------------------------------------------------
# Pallas kernel: one (batch, Y-tile) block of the decoder
# ----------------------------------------------------------------------------
def _decoder_kernel(x_ref, uw_ref, fw_ref, fb_ref, tgt_ref,
                    y_ref, alpha_ref, m_ref, bce_ref):
    xb = x_ref[0]                                          # (T, D)   bf16
    uw = uw_ref[...]                                       # (Yt, D)  bf16

    # scores[y, t] = sum_d U[y, d] * x[t, d]  -> single MXU matmul, f32 acc
    scores = jax.lax.dot_general(
        uw, xb, (((1,), (1,)), ((), ())),
        preferred_element_type=jnp.float32)                # (Yt, T) f32

    # softmax over T in f32 (exp on EUP, approx reciprocal on EUP)
    s_max = jnp.max(scores, axis=1, keepdims=True)
    e = jnp.exp(scores - s_max)
    denom = jnp.sum(e, axis=1, keepdims=True)
    alpha = e * pl.reciprocal(denom, approx=True)          # (Yt, T) f32

    # m = alpha @ x   (bf16 operands, f32 MXU accumulation)
    m = jnp.dot(alpha.astype(jnp.bfloat16), xb,
                preferred_element_type=jnp.float32)        # (Yt, D) f32

    alpha_ref[0] = alpha
    m_ref[0] = m

    # y = sum(final_w * m, -1) + final_b   (small VPU work, f32)
    y = jnp.sum(fw_ref[...] * m, axis=1)[None, :] + fb_ref[...]   # (1, Yt)
    y_ref[0] = y

    # per-label BCE-with-logits terms (numerically stable); mean in wrapper
    t = tgt_ref[0]                                         # (1, Yt)
    bce_ref[0] = (jnp.maximum(y, 0.0) - y * t
                  + jnp.log(1.0 + jnp.exp(-jnp.abs(y))))


# ----------------------------------------------------------------------------
# Wrapper
# ----------------------------------------------------------------------------
def decoder_forward(x, target, u_w, final_w, final_b, text_inputs=None,
                    *, y_tile=None):
    """RandomlyInitializedDecoder.forward(x, target, text_inputs).

    x:        (B, T, D) float32
    target:   (B, Y)    float32 multi-hot labels
    u_w:      (Y, D)    U.weight
    final_w:  (Y, D)    final.weight
    final_b:  (Y,)      final.bias
    returns (y, loss, alpha, m)
    """
    del text_inputs  # unused by the PyTorch forward as well
    B, T, D = x.shape
    Y = u_w.shape[0]

    if y_tile is None:
        y_tile = Y if Y <= 512 else 512
    # TODO(synk): pad Y up to a multiple of the tile for label counts that are
    # not divisible by y_tile (e.g. Y=8922) instead of asserting.
    assert Y % y_tile == 0, "Y must be divisible by the Y tile"
    n_yt = Y // y_tile

    # bf16 MXU operands (halves HBM->VMEM bytes too); f32 elsewhere.
    x_bf = x.astype(jnp.bfloat16)
    uw_bf = u_w.astype(jnp.bfloat16)
    fw = final_w.astype(jnp.float32)
    fb = final_b.reshape(1, Y).astype(jnp.float32)
    tgt = target.reshape(B, 1, Y).astype(jnp.float32)

    # advisory cost estimate for the XLA scheduler
    flops = int(B * (4 * Y * T * D + 2 * Y * D + 6 * Y * T))
    transcendentals = int(B * Y * (T + 3))
    bytes_accessed = int(
        B * n_yt * T * D * 2                      # x (re-read once per Y tile)
        + B * Y * D * 2 + B * Y * D * 4           # U.weight (bf16), final.weight
        + 2 * B * Y * 4                           # final.bias, target
        + B * Y * T * 4 + B * Y * D * 4           # alpha, m
        + 2 * B * Y * 4)                          # y, bce terms

    y3, alpha, m, bce3 = pl.pallas_call(
        _decoder_kernel,
        out_shape=(
            jax.ShapeDtypeStruct((B, 1, Y), jnp.float32),   # y
            jax.ShapeDtypeStruct((B, Y, T), jnp.float32),   # alpha
            jax.ShapeDtypeStruct((B, Y, D), jnp.float32),   # m
            jax.ShapeDtypeStruct((B, 1, Y), jnp.float32),   # per-label BCE terms
        ),
        grid=(B, n_yt),
        in_specs=[
            pl.BlockSpec((1, T, D), lambda b, j: (b, 0, 0)),        # x
            pl.BlockSpec((y_tile, D), lambda b, j: (j, 0)),         # U.weight
            pl.BlockSpec((y_tile, D), lambda b, j: (j, 0)),         # final.weight
            pl.BlockSpec((1, y_tile), lambda b, j: (0, j)),         # final.bias
            pl.BlockSpec((1, 1, y_tile), lambda b, j: (b, 0, j)),   # target
        ],
        out_specs=(
            pl.BlockSpec((1, 1, y_tile), lambda b, j: (b, 0, j)),   # y
            pl.BlockSpec((1, y_tile, T), lambda b, j: (b, j, 0)),   # alpha
            pl.BlockSpec((1, y_tile, D), lambda b, j: (b, j, 0)),   # m
            pl.BlockSpec((1, 1, y_tile), lambda b, j: (b, 0, j)),   # bce
        ),
        compiler_params=pltpu.CompilerParams(
            dimension_semantics=("parallel", "parallel")),
        cost_estimate=pl.CostEstimate(
            flops=flops, transcendentals=transcendentals,
            bytes_accessed=bytes_accessed),
    )(x_bf, uw_bf, fw, fb, tgt)

    y = y3[:, 0, :]
    loss = jnp.mean(bce3)   # final scalar mean of the in-kernel BCE terms
    return y, loss, alpha, m


# ----------------------------------------------------------------------------
# Pure-JAX f32 reference (independent path) for a sanity check
# ----------------------------------------------------------------------------
def ref_decoder(x, target, u_w, final_w, final_b):
    scores = jnp.einsum("yd,btd->byt", u_w, x)
    alpha = jax.nn.softmax(scores, axis=2)
    m = jnp.einsum("byt,btd->byd", alpha, x)
    y = jnp.sum(final_w[None] * m, axis=2) + final_b[None]
    l = jnp.maximum(y, 0.0) - y * target + jnp.log1p(jnp.exp(-jnp.abs(y)))
    return y, jnp.mean(l), alpha, m


# ----------------------------------------------------------------------------
if __name__ == "__main__":
    # Small shapes consistent with the module: x is (batch, seq, input_size),
    # Y labels.  B=2, T=16, D=64, Y=16.
    B, T, D, Y = 2, 16, 64, 16
    key = jax.random.PRNGKey(0)
    kx, kt, ku, kf, kb = jax.random.split(key, 5)

    x = jax.random.uniform(kx, (B, T, D), jnp.float32, -0.5, 0.5)
    target = jax.random.bernoulli(kt, 0.3, (B, Y)).astype(jnp.float32)

    # xavier_uniform for U.weight / final.weight; PyTorch-default bias init
    bound = float(np.sqrt(6.0 / (D + Y)))
    u_w = jax.random.uniform(ku, (Y, D), jnp.float32, -bound, bound)
    final_w = jax.random.uniform(kf, (Y, D), jnp.float32, -bound, bound)
    b_bound = 1.0 / float(np.sqrt(D))
    final_b = jax.random.uniform(kb, (Y,), jnp.float32, -b_bound, b_bound)

    y, loss, alpha, m = jax.block_until_ready(
        decoder_forward(x, target, u_w, final_w, final_b, text_inputs=None))

    # sanity check against independent pure-JAX f32 reference
    y_r, loss_r, alpha_r, m_r = ref_decoder(x, target, u_w, final_w, final_b)
    np.testing.assert_allclose(np.asarray(y), np.asarray(y_r), rtol=2e-2, atol=2e-2)
    np.testing.assert_allclose(np.asarray(alpha), np.asarray(alpha_r), rtol=2e-2, atol=2e-2)
    np.testing.assert_allclose(np.asarray(m), np.asarray(m_r), rtol=2e-2, atol=2e-2)
    np.testing.assert_allclose(float(loss), float(loss_r), rtol=2e-2, atol=2e-2)

    print("KERNEL_OK")
</pallas_src>

<mosaic_0001>
module attributes {stable_mosaic.version = 11 : i64} {
  func.func @_decoder_kernel(%arg0: i32, %arg1: i32, %arg2: memref<1x16x64xbf16, #tpu.memory_space<vmem>>, %arg3: memref<16x64xbf16, #tpu.memory_space<vmem>>, %arg4: memref<16x64xf32, #tpu.memory_space<vmem>>, %arg5: memref<1x16xf32, #tpu.memory_space<vmem>>, %arg6: memref<1x1x16xf32, #tpu.memory_space<vmem>>, %arg7: memref<1x1x16xf32, #tpu.memory_space<vmem>>, %arg8: memref<1x16x16xf32, #tpu.memory_space<vmem>>, %arg9: memref<1x16x64xf32, #tpu.memory_space<vmem>>, %arg10: memref<1x1x16xf32, #tpu.memory_space<vmem>>) attributes {dimension_semantics = [#tpu.dimension_semantics<parallel>, #tpu.dimension_semantics<parallel>], iteration_bounds = array<i64: 2, 1>, scalar_prefetch = 0 : i64, scratch_operands = 0 : i64, tpu.core_type = #tpu.core_type<tc>, window_params = [{transform_indices = @transform_0, window_bounds = array<i64: 1, 16, 64>}, {transform_indices = @transform_1, window_bounds = array<i64: 16, 64>}, {transform_indices = @transform_2, window_bounds = array<i64: 16, 64>}, {transform_indices = @transform_3, window_bounds = array<i64: 1, 16>}, {transform_indices = @transform_4, window_bounds = array<i64: 1, 1, 16>}, {transform_indices = @transform_5, window_bounds = array<i64: 1, 1, 16>}, {transform_indices = @transform_6, window_bounds = array<i64: 1, 16, 16>}, {transform_indices = @transform_7, window_bounds = array<i64: 1, 16, 64>}, {transform_indices = @transform_8, window_bounds = array<i64: 1, 1, 16>}]} {
    %c0 = arith.constant 0 : index
    %c0_0 = arith.constant 0 : index
    %c0_1 = arith.constant 0 : index
    %0 = vector.load %arg2[%c0, %c0_0, %c0_1] : memref<1x16x64xbf16, #tpu.memory_space<vmem>>, vector<1x16x64xbf16>
    %1 = vector.shape_cast %0 : vector<1x16x64xbf16> to vector<16x64xbf16>
    %c0_2 = arith.constant 0 : index
    %c0_3 = arith.constant 0 : index
    %2 = vector.load %arg3[%c0_2, %c0_3] : memref<16x64xbf16, #tpu.memory_space<vmem>>, vector<16x64xbf16>
    %cst = arith.constant dense<0.000000e+00> : vector<16x16xf32>
    %3 = tpu.matmul %2, %1, %cst {dimension_numbers = #tpu.dot_dimension_numbers<[1], [1], [0], [0], [0, 0, 1, 0], [], []>} : vector<16x64xbf16>, vector<16x64xbf16>, vector<16x16xf32> -> vector<16x16xf32>
    %cst_4 = arith.constant dense<0xFF800000> : vector<16xf32>
    %4 = vector.multi_reduction <maximumf>, %3, %cst_4 [1] : vector<16x16xf32> to vector<16xf32>
    %5 = vector.shape_cast %4 : vector<16xf32> to vector<16x1xf32>
    %6 = vector.broadcast %5 : vector<16x1xf32> to vector<16x16xf32>
    %7 = arith.subf %3, %6 : vector<16x16xf32>
    %8 = math.exp %7 : vector<16x16xf32>
    %cst_5 = arith.constant dense<0.000000e+00> : vector<16xf32>
    %9 = vector.multi_reduction <add>, %8, %cst_5 [1] : vector<16x16xf32> to vector<16xf32>
    %10 = vector.shape_cast %9 : vector<16xf32> to vector<16x1xf32>
    %11 = tpu.reciprocal %10 {approx = true} : vector<16x1xf32> -> vector<16x1xf32>
    %12 = vector.broadcast %11 : vector<16x1xf32> to vector<16x16xf32>
    %13 = arith.mulf %8, %12 : vector<16x16xf32>
    %14 = arith.truncf %13 : vector<16x16xf32> to vector<16x16xbf16>
    %cst_6 = arith.constant dense<0.000000e+00> : vector<16x64xf32>
    %15 = tpu.matmul %14, %1, %cst_6 {dimension_numbers = #tpu.dot_dimension_numbers<[1], [0], [0], [1], [0, 0, 1, 1], [], []>} : vector<16x16xbf16>, vector<16x64xbf16>, vector<16x64xf32> -> vector<16x64xf32>
    %c0_7 = arith.constant 0 : index
    %c0_8 = arith.constant 0 : index
    %c0_9 = arith.constant 0 : index
    %16 = vector.load %arg8[%c0_7, %c0_8, %c0_9] : memref<1x16x16xf32, #tpu.memory_space<vmem>>, vector<1x16x16xf32>
    %17 = vector.shape_cast %16 : vector<1x16x16xf32> to vector<16x16xf32>
    %18 = vector.shape_cast %13 : vector<16x16xf32> to vector<1x16x16xf32>
    tpu.vector_store %arg8[%c0_7, %c0_8, %c0_9], %18 {strides = array<i32>} : memref<1x16x16xf32, #tpu.memory_space<vmem>>, vector<1x16x16xf32>,
    %c0_10 = arith.constant 0 : index
    %c0_11 = arith.constant 0 : index
    %c0_12 = arith.constant 0 : index
    %19 = vector.load %arg9[%c0_10, %c0_11, %c0_12] : memref<1x16x64xf32, #tpu.memory_space<vmem>>, vector<1x16x64xf32>
    %20 = vector.shape_cast %19 : vector<1x16x64xf32> to vector<16x64xf32>
    %21 = vector.shape_cast %15 : vector<16x64xf32> to vector<1x16x64xf32>
    tpu.vector_store %arg9[%c0_10, %c0_11, %c0_12], %21 {strides = array<i32>} : memref<1x16x64xf32, #tpu.memory_space<vmem>>, vector<1x16x64xf32>,
    %c0_13 = arith.constant 0 : index
    %c0_14 = arith.constant 0 : index
    %22 = vector.load %arg4[%c0_13, %c0_14] : memref<16x64xf32, #tpu.memory_space<vmem>>, vector<16x64xf32>
    %23 = arith.mulf %22, %15 : vector<16x64xf32>
    %cst_15 = arith.constant dense<0.000000e+00> : vector<16xf32>
    %24 = vector.multi_reduction <add>, %23, %cst_15 [1] : vector<16x64xf32> to vector<16xf32>
    %25 = vector.shape_cast %24 : vector<16xf32> to vector<1x16xf32>
    %c0_16 = arith.constant 0 : index
    %c0_17 = arith.constant 0 : index
    %26 = vector.load %arg5[%c0_16, %c0_17] : memref<1x16xf32, #tpu.memory_space<vmem>>, vector<1x16xf32>
    %27 = arith.addf %25, %26 : vector<1x16xf32>
    %c0_18 = arith.constant 0 : index
    %c0_19 = arith.constant 0 : index
    %c0_20 = arith.constant 0 : index
    %28 = vector.load %arg7[%c0_18, %c0_19, %c0_20] : memref<1x1x16xf32, #tpu.memory_space<vmem>>, vector<1x1x16xf32>
    %29 = vector.shape_cast %28 : vector<1x1x16xf32> to vector<1x16xf32>
    %30 = vector.shape_cast %27 : vector<1x16xf32> to vector<1x1x16xf32>
    tpu.vector_store %arg7[%c0_18, %c0_19, %c0_20], %30 {strides = array<i32>} : memref<1x1x16xf32, #tpu.memory_space<vmem>>, vector<1x1x16xf32>,
    %c0_21 = arith.constant 0 : index
    %c0_22 = arith.constant 0 : index
    %c0_23 = arith.constant 0 : index
    %31 = vector.load %arg6[%c0_21, %c0_22, %c0_23] : memref<1x1x16xf32, #tpu.memory_space<vmem>>, vector<1x1x16xf32>
    %32 = vector.shape_cast %31 : vector<1x1x16xf32> to vector<1x16xf32>
    %cst_24 = arith.constant 0.000000e+00 : f32
    %33 = vector.broadcast %cst_24 : f32 to vector<1x16xf32>
    %34 = arith.maximumf %27, %33 : vector<1x16xf32>
    %35 = arith.mulf %27, %32 : vector<1x16xf32>
    %36 = arith.subf %34, %35 : vector<1x16xf32>
    %37 = math.absf %27 : vector<1x16xf32>
    %cst_25 = arith.constant 0.000000e+00 : f32
    %38 = vector.broadcast %cst_25 : f32 to vector<1x16xf32>
    %39 = arith.subf %38, %37 : vector<1x16xf32>
    %40 = math.exp %39 : vector<1x16xf32>
    %cst_26 = arith.constant 1.000000e+00 : f32
    %41 = vector.broadcast %cst_26 : f32 to vector<1x16xf32>
    %42 = arith.addf %41, %40 : vector<1x16xf32>
    %43 = math.log %42 : vector<1x16xf32>
    %44 = arith.addf %36, %43 : vector<1x16xf32>
    %c0_27 = arith.constant 0 : index
    %c0_28 = arith.constant 0 : index
    %c0_29 = arith.constant 0 : index
    %45 = vector.load %arg10[%c0_27, %c0_28, %c0_29] : memref<1x1x16xf32, #tpu.memory_space<vmem>>, vector<1x1x16xf32>
    %46 = vector.shape_cast %45 : vector<1x1x16xf32> to vector<1x16xf32>
    %47 = vector.shape_cast %44 : vector<1x16xf32> to vector<1x1x16xf32>
    tpu.vector_store %arg10[%c0_27, %c0_28, %c0_29], %47 {strides = array<i32>} : memref<1x1x16xf32, #tpu.memory_space<vmem>>, vector<1x1x16xf32>,
    return
  }
  func.func @transform_0(%arg0: i32, %arg1: i32) -> (i32, i32, i32) {
    %c0_i32 = arith.constant 0 : i32
    %c0_i32_0 = arith.constant 0 : i32
    %c0_i32_1 = arith.constant 0 : i32
    return %arg0, %c0_i32, %c0_i32_0 : i32, i32, i32
  }
  func.func @transform_1(%arg0: i32, %arg1: i32) -> (i32, i32) {
    %c0_i32 = arith.constant 0 : i32
    %c0_i32_0 = arith.constant 0 : i32
    return %arg1, %c0_i32 : i32, i32
  }
  func.func @transform_2(%arg0: i32, %arg1: i32) -> (i32, i32) {
    %c0_i32 = arith.constant 0 : i32
    %c0_i32_0 = arith.constant 0 : i32
    return %arg1, %c0_i32 : i32, i32
  }
  func.func @transform_3(%arg0: i32, %arg1: i32) -> (i32, i32) {
    %c0_i32 = arith.constant 0 : i32
    %c0_i32_0 = arith.constant 0 : i32
    return %c0_i32, %arg1 : i32, i32
  }
  func.func @transform_4(%arg0: i32, %arg1: i32) -> (i32, i32, i32) {
    %c0_i32 = arith.constant 0 : i32
    %c0_i32_0 = arith.constant 0 : i32
    return %arg0, %c0_i32, %arg1 : i32, i32, i32
  }
  func.func @transform_5(%arg0: i32, %arg1: i32) -> (i32, i32, i32) {
    %c0_i32 = arith.constant 0 : i32
    %c0_i32_0 = arith.constant 0 : i32
    return %arg0, %c0_i32, %arg1 : i32, i32, i32
  }
  func.func @transform_6(%arg0: i32, %arg1: i32) -> (i32, i32, i32) {
    %c0_i32 = arith.constant 0 : i32
    %c0_i32_0 = arith.constant 0 : i32
    return %arg0, %arg1, %c0_i32 : i32, i32, i32
  }
  func.func @transform_7(%arg0: i32, %arg1: i32) -> (i32, i32, i32) {
    %c0_i32 = arith.constant 0 : i32
    %c0_i32_0 = arith.constant 0 : i32
    return %arg0, %arg1, %c0_i32 : i32, i32, i32
  }
  func.func @transform_8(%arg0: i32, %arg1: i32) -> (i32, i32, i32) {
    %c0_i32 = arith.constant 0 : i32
    %c0_i32_0 = arith.constant 0 : i32
    return %arg0, %c0_i32, %arg1 : i32, i32, i32
  }
}

</mosaic_0001>

<llo_original>
// kernel: tpu_custom_call.1
$region0: #{tpu_custom_call.1}
  #allocation0 [shape = 'u32[]', space=smem, size = 0x4, offset = 0x4, fixed_abs, tag = 'smem constant byte address 0x4 - core index']
  #allocation1 [shape = 'u32[144,128]{1,0:T(1,128)}', space=vmem, size = 0x12000, scoped, tag = 'internal scratch']
  %s0 = inlined_call_operand.hbm [shape: bf16[2,16,64], index: 0, kind: input, shape index: {}]
  %s1 = inlined_call_operand.hbm [shape: bf16[16,64], index: 1, kind: input, shape index: {}]
  %s2 = inlined_call_operand.hbm [shape: f32[16,64], index: 2, kind: input, shape index: {}]
  %s3 = inlined_call_operand.vmem [shape: f32[1,16], index: 3, kind: input, shape index: {}]
  %s4 = inlined_call_operand.vmem [shape: f32[2,1,16], index: 4, kind: input, shape index: {}]
  %s5 = inlined_call_operand.hbm [shape: f32[2,1,16], index: 5, kind: output, shape index: {0}]
  %s6 = inlined_call_operand.hbm [shape: f32[2,16,16], index: 6, kind: output, shape index: {1}]
  %s7 = inlined_call_operand.hbm [shape: f32[2,16,64], index: 7, kind: output, shape index: {2}]
  %s8 = inlined_call_operand.hbm [shape: f32[2,1,16], index: 8, kind: output, shape index: {3}]
  %9 = xla_tuple %s5, %s6, %s7, %s8
  %s10 = sld [smem:[#allocation0]]
  $region89: #{tpu_custom_call.1} parent=0
    _
  %s12 = ssub.s32 1, %s10
  %s13 = scalar_select 0, %s12, %s10
  $region1: #{tpu_custom_call.1} parent=0
    #allocation2 [shape = 'u8[8192]{0}', space=vmem, size = 0x2000, scoped, tag = 'input window, operand 0']
    #allocation3 [shape = 's32[2]{0}', space=sflag, size = 0x8, scoped, tag = 'scoped memory for tpu_custom_call.1']
    #allocation4 [shape = 's32[2]{0}', space=sflag, size = 0x8, scoped, tag = 'scoped memory for tpu_custom_call.1']
    #allocation5 [shape = 'u8[4096]{0}', space=vmem, size = 0x1000, scoped, tag = 'input window, operand 1, single buffered']
    #allocation6 [shape = 's32[1]{0}', space=sflag, size = 0x4, scoped, tag = 'scoped memory for tpu_custom_call.1']
    #allocation7 [shape = 'u8[8192]{0}', space=vmem, size = 0x2000, scoped, tag = 'input window, operand 2, single buffered']
    #allocation8 [shape = 'u8[1024]{0}', space=vmem, size = 0x400, scoped, tag = 'output window, operand 0']
    #allocation9 [shape = 'u8[16384]{0}', space=vmem, size = 0x4000, scoped, tag = 'output window, operand 1']
    #allocation10 [shape = 's32[2]{0}', space=sflag, size = 0x8, scoped, tag = 'scoped memory for tpu_custom_call.1']
    #allocation11 [shape = 'u8[16384]{0}', space=vmem, size = 0x4000, scoped, tag = 'output window, operand 2']
    #allocation12 [shape = 'u8[1024]{0}', space=vmem, size = 0x400, scoped, tag = 'output window, operand 3']
    #allocation13 [shape = 's32[2]{0}', space=sflag, size = 0x8, scoped, tag = 'scoped memory for tpu_custom_call.1']
    %14 = vsyncpa [#allocation3], 0
    %s15 = scalar_lea.sflag [#allocation3], 1
    %16 = vsyncpa %s15, 0
    %17 = vsyncpa [#allocation6], 0
    %18 = vsyncpa [#allocation4], 0
    %s19 = scalar_lea.sflag [#allocation4], 1
    %20 = vsyncpa %s19, 0
    %21 = vsyncpa [#allocation10], 0
    %s22 = scalar_lea.sflag [#allocation10], 1
    %23 = vsyncpa %s22, 0
    %24 = vsyncpa [#allocation13], 0
    %s25 = scalar_lea.sflag [#allocation13], 1
    %26 = vsyncpa %s25, 0
    loop: start=0, step=1, limit=4
    $region2: #{tpu_custom_call.1} parent=1 // loop_pre_header
      _
    $region3: #{tpu_custom_call.1} parent=1 // loop_header
      %s28 = sphi 0, %s32
      %p29 = scmp.ge.s32.totalorder %s28, 4
      %s35 = sphi 0, %s47
      %s36 = sphi 0, %s43
      %s37 = sphi 0, %s35
      %s38 = sphi 0, %s36
      %s39 = sphi 0, %s37
      %s40 = sphi 0, %s38
      %s50 = sphi 0, %s52
      %s53 = sphi 0, %s50
      %s54 = sphi 0, %s53
      %s70 = sphi 0, %s54
      %s76 = sphi 0, %s78
      %s79 = sphi 0, %s76
      %s80 = sphi 0, %s79
      %s96 = sphi 0, %s80
      %s102 = sphi 0, %s104
      %s105 = sphi 0, %s102
      %s106 = sphi 0, %s105
      %s122 = sphi 0, %s106
      %s128 = sphi 0, %s130
      %s131 = sphi 0, %s128
      %s132 = sphi 0, %s131
      %s148 = sphi 0, %s132
      %s156 = sphi 0, %s158
      %s159 = sphi 0, %s156
      %s160 = sphi 0, %s159
      %s176 = sphi 0, %s160
      %s184 = sphi 0, %s186
      %s187 = sphi 0, %s184
      %s188 = sphi 0, %s187
      %s204 = sphi 0, %s188
      %s212 = sphi 0, %s214
      %s215 = sphi 0, %s212
      %s216 = sphi 0, %s215
      %s232 = sphi 0, %s216
      %s240 = sphi 0, %s242
      %s243 = sphi 0, %s240
      %s244 = sphi 0, %s243
      %s260 = sphi 0, %s244
      %s268 = sphi 0, %s270
      %s271 = sphi 0, %s268
      %s272 = sphi 0, %s271
      %s288 = sphi 0, %s272
    $region4: #{tpu_custom_call.1} parent=1 // loop_header_branch
      %31 = sbr.rel (%p29) target = $region8
    $region5: #{tpu_custom_call.1} parent=1 // loop_body
      %s33 = ssub.s32 %s28, 1
      %s34 = ssub.s32 %s28, 2
      %s41 = sadd.s32 1, %s36
      %p42 = scmp.ge.s32.totalorder %s41, 1
      %s43 = scalar_select %p42, 0, %s41
      %s44 = sadd.s32 1, %s35
      %s45 = scalar_select %p42, %s44, %s35
      %p46 = scmp.ge.s32.totalorder %s45, 2
      %s47 = scalar_select %p46, 0, %s45
      %s48 = ssub.s32 %s35, %s47
      %p49 = scmp.eq.s32.totalorder %s48, 0
      %s51 = sadd.s32 %s50, 1
      %s52 = scalar_select %p49, %s50, %s51
      %p55 = pneg %p49
      %p56 = scmp.eq.s32.totalorder %s28, 1
      %p57 = por %p55, %p56
      %p58 = scmp.ne.s32.totalorder %s50, %s53
      %p59 = scmp.eq.s32.totalorder %s28, 0
      %p60 = por %p58, %p59
      %p61 = scmp.ne.s32.totalorder %s50, %s53
      %p62 = scmp.eq.s32.totalorder %s33, 1
      %p63 = por %p61, %p62
      %p64 = scmp.ne.s32.totalorder %s53, %s54
      %p65 = scmp.eq.s32.totalorder %s33, 0
      %p66 = por %p64, %p65
      %p67 = scmp.ne.s32.totalorder %s53, %s54
      %p68 = scmp.eq.s32.totalorder %s34, 1
      %p69 = por %p67, %p68
      %p71 = scmp.ne.s32.totalorder %s54, %s70
      %p72 = scmp.eq.s32.totalorder %s34, 0
      %p73 = por %p71, %p72
      %s74 = ssub.s32 %s36, %s43
      %p75 = scmp.eq.s32.totalorder %s74, 0
      %s77 = sadd.s32 %s76, 1
      %s78 = scalar_select %p75, %s76, %s77
      %p81 = pneg %p75
      %p82 = scmp.eq.s32.totalorder %s28, 1
      %p83 = por %p81, %p82
      %p84 = scmp.ne.s32.totalorder %s76, %s79
      %p85 = scmp.eq.s32.totalorder %s28, 0
      %p86 = por %p84, %p85
      %p87 = scmp.ne.s32.totalorder %s76, %s79
      %p88 = scmp.eq.s32.totalorder %s33, 1
      %p89 = por %p87, %p88
      %p90 = scmp.ne.s32.totalorder %s79, %s80
      %p91 = scmp.eq.s32.totalorder %s33, 0
      %p92 = por %p90, %p91
      %p93 = scmp.ne.s32.totalorder %s79, %s80
      %p94 = scmp.eq.s32.totalorder %s34, 1
      %p95 = por %p93, %p94
      %p97 = scmp.ne.s32.totalorder %s80, %s96
      %p98 = scmp.eq.s32.totalorder %s34, 0
      %p99 = por %p97, %p98
      %s100 = ssub.s32 %s36, %s43
      %p101 = scmp.eq.s32.totalorder %s100, 0
      %s103 = sadd.s32 %s102, 1
      %s104 = scalar_select %p101, %s102, %s103
      %p107 = pneg %p101
      %p108 = scmp.eq.s32.totalorder %s28, 1
      %p109 = por %p107, %p108
      %p110 = scmp.ne.s32.totalorder %s102, %s105
      %p111 = scmp.eq.s32.totalorder %s28, 0
      %p112 = por %p110, %p111
      %p113 = scmp.ne.s32.totalorder %s102, %s105
      %p114 = scmp.eq.s32.totalorder %s33, 1
      %p115 = por %p113, %p114
      %p116 = scmp.ne.s32.totalorder %s105, %s106
      %p117 = scmp.eq.s32.totalorder %s33, 0
      %p118 = por %p116, %p117
      %p119 = scmp.ne.s32.totalorder %s105, %s106
      %p120 = scmp.eq.s32.totalorder %s34, 1
      %p121 = por %p119, %p120
      %p123 = scmp.ne.s32.totalorder %s106, %s122
      %p124 = scmp.eq.s32.totalorder %s34, 0
      %p125 = por %p123, %p124
      %s126 = ssub.s32 %s36, %s43
      %p127 = scmp.eq.s32.totalorder %s126, 0
      %s129 = sadd.s32 %s128, 1
      %s130 = scalar_select %p127, %s128, %s129
      %p133 = pneg %p127
      %p134 = scmp.eq.s32.totalorder %s28, 1
      %p135 = por %p133, %p134
      %p136 = scmp.ne.s32.totalorder %s128, %s131
      %p137 = scmp.eq.s32.totalorder %s28, 0
      %p138 = por %p136, %p137
      %p139 = scmp.ne.s32.totalorder %s128, %s131
      %p140 = scmp.eq.s32.totalorder %s33, 1
      %p141 = por %p139, %p140
      %p142 = scmp.ne.s32.totalorder %s131, %s132
      %p143 = scmp.eq.s32.totalorder %s33, 0
      %p144 = por %p142, %p143
      %p145 = scmp.ne.s32.totalorder %s131, %s132
      %p146 = scmp.eq.s32.totalorder %s34, 1
      %p147 = por %p145, %p146
      %p149 = scmp.ne.s32.totalorder %s132, %s148
      %p150 = scmp.eq.s32.totalorder %s34, 0
      %p151 = por %p149, %p150
      %s152 = ssub.s32 %s35, %s47
      %s153 = ssub.s32 %s36, %s43
      %s154 = sor.u32 %s152, %s153
      %p155 = scmp.eq.s32.totalorder %s154, 0
      %s157 = sadd.s32 %s156, 1
      %s158 = scalar_select %p155, %s156, %s157
      %p161 = pneg %p155
      %p162 = scmp.eq.s32.totalorder %s28, 1
      %p163 = por %p161, %p162
      %p164 = scmp.ne.s32.totalorder %s156, %s159
      %p165 = scmp.eq.s32.totalorder %s28, 0
      %p166 = por %p164, %p165
      %p167 = scmp.ne.s32.totalorder %s156, %s159
      %p168 = scmp.eq.s32.totalorder %s33, 1
      %p169 = por %p167, %p168
      %p170 = scmp.ne.s32.totalorder %s159, %s160
      %p171 = scmp.eq.s32.totalorder %s33, 0
      %p172 = por %p170, %p171
      %p173 = scmp.ne.s32.totalorder %s159, %s160
      %p174 = scmp.eq.s32.totalorder %s34, 1
      %p175 = por %p173, %p174
      %p177 = scmp.ne.s32.totalorder %s160, %s176
      %p178 = scmp.eq.s32.totalorder %s34, 0
      %p179 = por %p177, %p178
      %s180 = ssub.s32 %s35, %s47
      %s181 = ssub.s32 %s36, %s43
      %s182 = sor.u32 %s180, %s181
      %p183 = scmp.eq.s32.totalorder %s182, 0
      %s185 = sadd.s32 %s184, 1
      %s186 = scalar_select %p183, %s184, %s185
      %p189 = pneg %p183
      %p190 = scmp.eq.s32.totalorder %s28, 1
      %p191 = por %p189, %p190
      %p192 = scmp.ne.s32.totalorder %s184, %s187
      %p193 = scmp.eq.s32.totalorder %s28, 0
      %p194 = por %p192, %p193
      %p195 = scmp.ne.s32.totalorder %s184, %s187
      %p196 = scmp.eq.s32.totalorder %s33, 1
      %p197 = por %p195, %p196
      %p198 = scmp.ne.s32.totalorder %s187, %s188
      %p199 = scmp.eq.s32.totalorder %s33, 0
      %p200 = por %p198, %p199
      %p201 = scmp.ne.s32.totalorder %s187, %s188
      %p202 = scmp.eq.s32.totalorder %s34, 1
      %p203 = por %p201, %p202
      %p205 = scmp.ne.s32.totalorder %s188, %s204
      %p206 = scmp.eq.s32.totalorder %s34, 0
      %p207 = por %p205, %p206
      %s208 = ssub.s32 %s35, %s47
      %s209 = ssub.s32 %s36, %s43
      %s210 = sor.u32 %s208, %s209
      %p211 = scmp.eq.s32.totalorder %s210, 0
      %s213 = sadd.s32 %s212, 1
      %s214 = scalar_select %p211, %s212, %s213
      %p217 = pneg %p211
      %p218 = scmp.eq.s32.totalorder %s28, 1
      %p219 = por %p217, %p218
      %p220 = scmp.ne.s32.totalorder %s212, %s215
      %p221 = scmp.eq.s32.totalorder %s28, 0
      %p222 = por %p220, %p221
      %p223 = scmp.ne.s32.totalorder %s212, %s215
      %p224 = scmp.eq.s32.totalorder %s33, 1
      %p225 = por %p223, %p224
      %p226 = scmp.ne.s32.totalorder %s215, %s216
      %p227 = scmp.eq.s32.totalorder %s33, 0
      %p228 = por %p226, %p227
      %p229 = scmp.ne.s32.totalorder %s215, %s216
      %p230 = scmp.eq.s32.totalorder %s34, 1
      %p231 = por %p229, %p230
      %p233 = scmp.ne.s32.totalorder %s216, %s232
      %p234 = scmp.eq.s32.totalorder %s34, 0
      %p235 = por %p233, %p234
      %s236 = ssub.s32 %s35, %s47
      %s237 = ssub.s32 %s36, %s43
      %s238 = sor.u32 %s236, %s237
      %p239 = scmp.eq.s32.totalorder %s238, 0
      %s241 = sadd.s32 %s240, 1
      %s242 = scalar_select %p239, %s240, %s241
      %p245 = pneg %p239
      %p246 = scmp.eq.s32.totalorder %s28, 1
      %p247 = por %p245, %p246
      %p248 = scmp.ne.s32.totalorder %s240, %s243
      %p249 = scmp.eq.s32.totalorder %s28, 0
      %p250 = por %p248, %p249
      %p251 = scmp.ne.s32.totalorder %s240, %s243
      %p252 = scmp.eq.s32.totalorder %s33, 1
      %p253 = por %p251, %p252
      %p254 = scmp.ne.s32.totalorder %s243, %s244
      %p255 = scmp.eq.s32.totalorder %s33, 0
      %p256 = por %p254, %p255
      %p257 = scmp.ne.s32.totalorder %s243, %s244
      %p258 = scmp.eq.s32.totalorder %s34, 1
      %p259 = por %p257, %p258
      %p261 = scmp.ne.s32.totalorder %s244, %s260
      %p262 = scmp.eq.s32.totalorder %s34, 0
      %p263 = por %p261, %p262
      %s264 = ssub.s32 %s35, %s47
      %s265 = ssub.s32 %s36, %s43
      %s266 = sor.u32 %s264, %s265
      %p267 = scmp.eq.s32.totalorder %s266, 0
      %s269 = sadd.s32 %s268, 1
      %s270 = scalar_select %p267, %s268, %s269
      %p273 = pneg %p267
      %p274 = scmp.eq.s32.totalorder %s28, 1
      %p275 = por %p273, %p274
      %p276 = scmp.ne.s32.totalorder %s268, %s271
      %p277 = scmp.eq.s32.totalorder %s28, 0
      %p278 = por %p276, %p277
      %p279 = scmp.ne.s32.totalorder %s268, %s271
      %p280 = scmp.eq.s32.totalorder %s33, 1
      %p281 = por %p279, %p280
      %p282 = scmp.ne.s32.totalorder %s271, %s272
      %p283 = scmp.eq.s32.totalorder %s33, 0
      %p284 = por %p282, %p283
      %p285 = scmp.ne.s32.totalorder %s271, %s272
      %p286 = scmp.eq.s32.totalorder %s34, 1
      %p287 = por %p285, %p286
      %p289 = scmp.ne.s32.totalorder %s272, %s288
      %p290 = scmp.eq.s32.totalorder %s34, 0
      %p291 = por %p289, %p290
      %p292 = scmp.le.s32.totalorder 1, %s28
      %p293 = scmp.lt.s32.totalorder %s28, 3
      %p294 = pnand %p292, %p293
      %p295 = pneg %p294
      // Predicated region
      $region9: #{tpu_custom_call.1} parent=5 // pred_check
        _
      $region10: #{tpu_custom_call.1} parent=5 // pred_check_branch
        %297 = sbr.rel (%p294) target = $region12
      $region11: #{tpu_custom_call.1} parent=5 // pred_region
        %s298 = ssub.s32 %s28, 1
        // Predicated region
        $region13: #{tpu_custom_call.1} parent=11 // pred_check
          %p299 = pneg %p92
        $region14: #{tpu_custom_call.1} parent=11 // pred_check_branch
          %301 = sbr.rel (%p299) target = $region16
        $region15: #{tpu_custom_call.1} parent=11 // pred_region
          %s302 = smul.u32 2, %s38
          %s304 = ssub.s32 128, 128
          %305 = vsyncadd [#allocation6], %s304
          %s306 = smul.addr %s302, 64
          %s307 = scalar_lea.hbm %s1, %s306
          %s308 = sshll.u32 [#allocation5], 4
          %s309 = int_to_ptr.vmem [resolvable:$true] %s308
          %314 = dma.hbm_to_vmem [thread:$0]  %s307, 128, %s309, [#allocation6], 64, 64, 4
        $region16: #{tpu_custom_call.1} parent=11 // pred_fallthru
          _
        // Predicated region
        $region17: #{tpu_custom_call.1} parent=11 // pred_check
          %p315 = pneg %p118
        $region18: #{tpu_custom_call.1} parent=11 // pred_check_branch
          %317 = sbr.rel (%p315) target = $region20
        $region19: #{tpu_custom_call.1} parent=11 // pred_region
          %s318 = smul.u32 2, %s38
          %s320 = ssub.s32 256, 256
          %321 = vsyncadd [#allocation6], %s320
          %s322 = smul.addr %s318, 128
          %s323 = scalar_lea.hbm %s2, %s322
          %s324 = sshll.u32 [#allocation7], 4
          %s325 = int_to_ptr.vmem [resolvable:$true] %s324
          %330 = dma.hbm_to_vmem [thread:$0]  %s323, 256, %s325, [#allocation6], 128, 128, 8
        $region20: #{tpu_custom_call.1} parent=11 // pred_fallthru
          _
        // Predicated region
        $region21: #{tpu_custom_call.1} parent=11 // pred_check
          %p331 = pneg %p144
        $region22: #{tpu_custom_call.1} parent=11 // pred_check_branch
          %333 = sbr.rel (%p331) target = $region24
        $region23: #{tpu_custom_call.1} parent=11 // pred_region
          %p334 = scmp.lt.s32.totalorder %s38, 0
          %s335 = scalar_select %p334, %s38, 0
          %s336 = scalar_lea.vmem %s3, %s335
        $region24: #{tpu_custom_call.1} parent=11 // pred_fallthru
          _
      $region12: #{tpu_custom_call.1} parent=5 // pred_fallthru
        _
      %p337 = scmp.lt.s32.totalorder %s28, 2
      // Predicated region
      $region25: #{tpu_custom_call.1} parent=5 // pred_check
        %p338 = pneg %p337
      $region26: #{tpu_custom_call.1} parent=5 // pred_check_branch
        %340 = sbr.rel (%p338) target = $region28
      $region27: #{tpu_custom_call.1} parent=5 // pred_region
        // Predicated region
        $region29: #{tpu_custom_call.1} parent=27 // pred_check
          %p341 = pneg %p60
        $region30: #{tpu_custom_call.1} parent=27 // pred_check_branch
          %343 = sbr.rel (%p341) target = $region32
        $region31: #{tpu_custom_call.1} parent=27 // pred_region
          %s344 = sand.u32 %s50, 1
          %s345 = scalar_lea.sflag [#allocation3], %s344
          %s346 = sand.u32 %s50, 1
          %s347 = smul.addr %s346, 8
          %s348 = scalar_lea.vmem [#allocation2], %s347
          %s350 = ssub.s32 128, 128
          %351 = vsyncadd %s345, %s350
          %s352 = smul.addr %s35, 2
          %s353 = smul.addr %s352, 64
          %s354 = scalar_lea.hbm %s0, %s353
          %s355 = sshll.u32 %s348, 4
          %s356 = int_to_ptr.vmem [resolvable:$true] %s355
          %361 = dma.hbm_to_vmem [thread:$0]  %s354, 128, %s356, %s345, 64, 64, 4
        $region32: #{tpu_custom_call.1} parent=27 // pred_fallthru
          _
        // Predicated region
        $region33: #{tpu_custom_call.1} parent=27 // pred_check
          %p362 = pneg %p166
        $region34: #{tpu_custom_call.1} parent=27 // pred_check_branch
          %364 = sbr.rel (%p362) target = $region36
        $region35: #{tpu_custom_call.1} parent=27 // pred_region
          %p365 = scmp.lt.s32.totalorder %s35, 1
          %s366 = scalar_select %p365, %s35, 1
          %p367 = scmp.lt.s32.totalorder %s36, 0
          %s368 = scalar_select %p367, %s36, 0
          %s369 = sadd.s32 %s368, %s366
          %s370 = scalar_lea.vmem %s4, %s369
        $region36: #{tpu_custom_call.1} parent=27 // pred_fallthru
          _
      $region28: #{tpu_custom_call.1} parent=5 // pred_fallthru
        _
      %p371 = scmp.le.s32.totalorder 1, %s28
      %p372 = scmp.lt.s32.totalorder %s28, 3
      %p373 = pnand %p371, %p372
      %p374 = pneg %p373
      // Predicated region
      $region37: #{tpu_custom_call.1} parent=5 // pred_check
        _
      $region38: #{tpu_custom_call.1} parent=5 // pred_check_branch
        %376 = sbr.rel (%p373) target = $region40
      $region39: #{tpu_custom_call.1} parent=5 // pred_region
        %s377 = ssub.s32 %s28, 1
        %s378 = sand.u32 %s53, 1
        %s379 = scalar_lea.sflag [#allocation3], %s378
        %s380 = sand.u32 %s53, 1
        %s381 = smul.addr %s380, 8
        %s382 = scalar_lea.vmem [#allocation2], %s381
        // Predicated region
        $region41: #{tpu_custom_call.1} parent=39 // pred_check
          %p383 = pneg %p66
        $region42: #{tpu_custom_call.1} parent=39 // pred_check_branch
          %385 = sbr.rel (%p383) target = $region44
        $region43: #{tpu_custom_call.1} parent=39 // pred_region
          %386 = dma.done %s379, 128
        $region44: #{tpu_custom_call.1} parent=39 // pred_fallthru
          _
        // Predicated region
        $region45: #{tpu_custom_call.1} parent=39 // pred_check
          %p387 = pneg %p92
        $region46: #{tpu_custom_call.1} parent=39 // pred_check_branch
          %389 = sbr.rel (%p387) target = $region48
        $region47: #{tpu_custom_call.1} parent=39 // pred_region
          %390 = dma.done [#allocation6], 128
        $region48: #{tpu_custom_call.1} parent=39 // pred_fallthru
          _
        // Predicated region
        $region49: #{tpu_custom_call.1} parent=39 // pred_check
          %p391 = pneg %p118
        $region50: #{tpu_custom_call.1} parent=39 // pred_check_branch
          %393 = sbr.rel (%p391) target = $region52
        $region51: #{tpu_custom_call.1} parent=39 // pred_region
          %394 = dma.done [#allocation6], 256
        $region52: #{tpu_custom_call.1} parent=39 // pred_fallthru
          _
        %s395 = sand.u32 %s53, 1
        %s396 = scalar_lea.sflag [#allocation3], %s395
        %s397 = sand.u32 %s53, 1
        %s398 = smul.addr %s397, 8
        %s399 = scalar_lea.vmem [#allocation2], %s398
        %p400 = pneg %p66
        %p401 = pneg %p63
        %p402 = pneg %p92
        %p403 = pneg %p89
        %p404 = pneg %p118
        %p405 = pneg %p115
        %p406 = scmp.lt.s32.totalorder %s38, 0
        %s407 = scalar_select %p406, %s38, 0
        %s408 = scalar_lea.vmem %s3, %s407
        %p409 = pneg %p144
        %p410 = pneg %p141
        %p411 = scmp.lt.s32.totalorder %s37, 1
        %s412 = scalar_select %p411, %s37, 1
        %p413 = scmp.lt.s32.totalorder %s38, 0
        %s414 = scalar_select %p413, %s38, 0
        %s415 = sadd.s32 %s414, %s412
        %s416 = scalar_lea.vmem %s4, %s415
        %p417 = pneg %p172
        %p418 = pneg %p169
        %p419 = pneg %p200
        %p420 = pneg %p197
        %s421 = sand.u32 %s187, 1
        %s422 = scalar_lea.sflag [#allocation4], %s421
        %s423 = sand.u32 %s187, 1
        %s424 = scalar_lea.vmem [#allocation8], %s423
        %p425 = pneg %p228
        %p426 = pneg %p225
        %s427 = sand.u32 %s33, 1
        %s428 = scalar_lea.sflag [#allocation10], %s427
        %s429 = sand.u32 %s215, 1
        %s430 = smul.addr %s429, 16
        %s431 = scalar_lea.vmem [#allocation9], %s430
        %p432 = pneg %p256
        %p433 = pneg %p253
        %s434 = sand.u32 %s33, 1
        %s435 = scalar_lea.sflag [#allocation10], %s434
        %s436 = sand.u32 %s243, 1
        %s437 = smul.addr %s436, 16
        %s438 = scalar_lea.vmem [#allocation11], %s437
        %p439 = pneg %p284
        %p440 = pneg %p281
        %s441 = sand.u32 %s271, 1
        %s442 = scalar_lea.sflag [#allocation13], %s441
        %s443 = sand.u32 %s271, 1
        %s444 = scalar_lea.vmem [#allocation12], %s443
        %s445 = smul.u32 2, %s38
        %s446 = smul.u32 2, %s38
        %p447 = scmp.lt.s32.totalorder %s38, 0
        %s448 = scalar_select %p447, %s38, 0
        %s449 = scalar_lea.vmem %s3, %s448
        %p450 = scmp.lt.s32.totalorder %s37, 1
        %s451 = scalar_select %p450, %s37, 1
        %p452 = scmp.lt.s32.totalorder %s38, 0
        %s453 = scalar_select %p452, %s38, 0
        %s454 = sadd.s32 %s453, %s451
        %s455 = scalar_lea.vmem %s4, %s454
        %s456 = smul.u32 2, %s38
        %s457 = smul.u32 2, %s38
        %v459 = vld [vmem:[%s382] sm:$0xf]
        %v460 = vld [vmem:[%s382 + $0x4] sm:$0xf]
        %v461 = vld [vmem:[#allocation5] sm:$0xf]
        %v462 = vld [vmem:[#allocation5 + $0x4] sm:$0xf]
        %v465 = vunpack.c.l.b16 %v461
        %v466 = vunpack.c.l.b16 %v462
        %v467 = vpack.c.b16 %v466, %v465
        %v470 = vunpack.c.l.b16 %v459
        %v471 = vunpack.c.l.b16 %v460
        %v472 = vpack.c.b16 %v471, %v470
        %vm473 = vcmask 523264
        %v475 = vsel %vm473, %v467, 0
        %v478 = vsel %vm473, %v472, 0
        %480 = vmatprep.subr.bf16.mxu0 0
        %481 = vmatpush1.bf16.xpose.msra.mxu0 %v478
        %482 = vmatprep.subr.bf16.mxu0 0
        %483 = vmatpush1.bf16.xpose.msra.mxu0 0
        %484 = vmatprep.subr.bf16.mxu0 0
        %485 = vmatpush1.bf16.xpose.msra.mxu0 0
        %486 = vmatprep.subr.bf16.mxu0 0
        %487 = vmatpush1.bf16.xpose.msra.mxu0 0
        %488 = vmatprep.subr.bf16.mxu0 0
        %489 = vmatpush1.bf16.xpose.msra.mxu0 0
        %490 = vmatprep.subr.bf16.mxu0 0
        %491 = vmatpush1.bf16.xpose.msra.mxu0 0
        %492 = vmatprep.subr.bf16.mxu0 0
        %493 = vmatpush1.bf16.xpose.msra.mxu0 0
        %494 = vmatprep.subr.bf16.mxu0 0
        %495 = vmatpush1.bf16.xpose.msra.mxu0 0
        %496 = vmatprep.subr.bf16.mxu0 0
        %497 = vmatpush1.bf16.xpose.msra.mxu0 0
        %498 = vmatprep.subr.bf16.mxu0 0
        %499 = vmatpush1.bf16.xpose.msra.mxu0 0
        %500 = vmatprep.subr.bf16.mxu0 0
        %501 = vmatpush1.bf16.xpose.msra.mxu0 0
        %502 = vmatprep.subr.bf16.mxu0 0
        %503 = vmatpush1.bf16.xpose.msra.mxu0 0
        %504 = vmatprep.subr.bf16.mxu0 0
        %505 = vmatpush1.bf16.xpose.msra.mxu0 0
        %506 = vmatprep.subr.bf16.mxu0 0
        %507 = vmatpush1.bf16.xpose.msra.mxu0 0
        %508 = vmatprep.subr.bf16.mxu0 0
        %509 = vmatpush1.bf16.xpose.msra.mxu0 0
        %510 = vmatprep.subr.bf16.mxu0 0
        %511 = vmatpush1.bf16.xpose.msra.mxu0 0
        %512 = vmatprep.mubr.bf16.mxu0 0
        %513 = vmatmul.mubr.bf16.gmra.mrb[0].mxu0 %v475
        %v514 = vpop.f32.mrb[0].mxu0
        %v515 = vadd.f32 0.0, %v514
        %v516 = vpop.f32.mrb[0].mxu0
        %v517 = vpop.f32.mrb[0].mxu0
        %v518 = vadd.f32 0.0, %v517
        %v519 = vpop.f32.mrb[0].mxu0
        %520 = vdwg.mxu0
        %vm521 = vcmask 130048
        %v522 = vsel %vm521, %v515, -inf
        %523 = vmax.xlane.f32.xlu0 %v522
        %v524 = vpop.xlane.xlu0 %523
        %v525 = vsel %vm521, %v518, -inf
        %526 = vmax.xlane.f32.xlu0 %v525
        %v527 = vpop.xlane.xlu0 %526
        %v528 = vsub.f32 %v515, %v524
        %v529 = vsub.f32 %v518, %v527
        %v530 = vmul.f32 %v528, 1.442695
        %v531 = vpow.pop %v530
        %v532 = vmul.f32 %v529, 1.442695
        %v533 = vpow.pop %v532
        %v534 = vsel %vm521, %v531, 0.0
        %535 = vadd.xlane.f32.xlu0 %v534
        %v536 = vpop.xlane.xlu0 %535
        %v537 = vsel %vm521, %v533, 0.0
        %538 = vadd.xlane.f32.xlu0 %v537
        %v539 = vpop.xlane.xlu0 %538
        %v540 = vrcp.pop %v536
        %v541 = vrcp.pop %v539
        %v542 = vmul.f32 %v531, %v540
        %v543 = vmul.f32 %v533, %v541
        %v544 = vpack.c.bf16 %v543, %v542
        %v547 = vsel %vm521, %v544, 0
        %549 = vmatprep.subr.bf16.mxu0 0
        %550 = vmatpush1.bf16.msra.mxu0 %v472
        %551 = vmatprep.subr.bf16.mxu0 0
        %552 = vmatpush1.bf16.msra.mxu0 0
        %553 = vmatprep.subr.bf16.mxu0 0
        %554 = vmatpush1.bf16.msra.mxu0 0
        %555 = vmatprep.subr.bf16.mxu0 0
        %556 = vmatpush1.bf16.msra.mxu0 0
        %557 = vmatprep.subr.bf16.mxu0 0
        %558 = vmatpush1.bf16.msra.mxu0 0
        %559 = vmatprep.subr.bf16.mxu0 0
        %560 = vmatpush1.bf16.msra.mxu0 0
        %561 = vmatprep.subr.bf16.mxu0 0
        %562 = vmatpush1.bf16.msra.mxu0 0
        %563 = vmatprep.subr.bf16.mxu0 0
        %564 = vmatpush1.bf16.msra.mxu0 0
        %565 = vmatprep.subr.bf16.mxu0 0
        %566 = vmatpush1.bf16.msra.mxu0 0
        %567 = vmatprep.subr.bf16.mxu0 0
        %568 = vmatpush1.bf16.msra.mxu0 0
        %569 = vmatprep.subr.bf16.mxu0 0
        %570 = vmatpush1.bf16.msra.mxu0 0
        %571 = vmatprep.subr.bf16.mxu0 0
        %572 = vmatpush1.bf16.msra.mxu0 0
        %573 = vmatprep.subr.bf16.mxu0 0
        %574 = vmatpush1.bf16.msra.mxu0 0
        %575 = vmatprep.subr.bf16.mxu0 0
        %576 = vmatpush1.bf16.msra.mxu0 0
        %577 = vmatprep.subr.bf16.mxu0 0
        %578 = vmatpush1.bf16.msra.mxu0 0
        %579 = vmatprep.subr.bf16.mxu0 0
        %580 = vmatpush1.bf16.msra.mxu0 0
        %581 = vmatprep.mubr.bf16.mxu0 0
        %582 = vmatmul.mubr.bf16.gmra.mrb[0].mxu0 %v547
        %v583 = vpop.f32.mrb[0].mxu0
        %v584 = vadd.f32 0.0, %v583
        %v585 = vpop.f32.mrb[0].mxu0
        %v586 = vpop.f32.mrb[0].mxu0
        %v587 = vadd.f32 0.0, %v586
        %v588 = vpop.f32.mrb[0].mxu0
        %589 = vdwg.mxu0
        %590 = vst.msk [vmem:[%s431] sm:$0xff] %vm521, %v542
        %591 = vst.msk [vmem:[%s431 + $0x8] sm:$0xff] %vm521, %v543
        %592 = vst.msk [vmem:[%s438] sm:$0xff] %vm473, %v584
        %593 = vst.msk [vmem:[%s438 + $0x8] sm:$0xff] %vm473, %v587
        %v594 = vld [vmem:[#allocation7] sm:$0xff]
        %v595 = vld [vmem:[#allocation7 + $0x8] sm:$0xff]
        %v596 = vmul.f32 %v594, %v584
        %v597 = vmul.f32 %v595, %v587
        %v598 = vsel %vm473, %v596, 0.0
        %599 = vadd.xlane.f32.xlu0 %v598
        %v600 = vpop.xlane.xlu0 %599
        %v601 = vsel %vm473, %v597, 0.0
        %602 = vadd.xlane.f32.xlu0 %v601
        %v603 = vpop.xlane.xlu0 %602
        %v604 = vld [vmem:[%s449] sm:$0x1]
        %v606 = vlaneseq
        %v607 = vshrl.u32 %v606, 7
        %v608 = vsub.s32 0, %v607
        %v609 = vrot.slane %v604, %v608
        %611 = vbcast.lane.b32.xlu0 %v609, 256
        %v612 = vpop.permute.xlu0 %611
        %s614 = sor.u32 256, 8
        %615 = vbcast.lane.b32.xlu0 %v609, %s614
        %v616 = vpop.permute.xlu0 %615
        %v619 = vadd.f32 %v600, %v612
        %v620 = vadd.f32 %v603, %v616
        %623 = vset.pattern.permute.xlu0 0
        %624 = vperm.xlu0 %623, %v619
        %v625 = vpop.permute.xlu0 %624
        %626 = vset.pattern.permute.xlu0 0
        %627 = vperm.xlu0 %626, %v620
        %v628 = vpop.permute.xlu0 %627
        %v629 = vlaneseq
        %v630 = vand.u32 %v629, 127
        %v631 = vlaneseq
        %v632 = vshrl.u32 %v631, 7
        %v633 = vsub.s32 %v630, %v632
        %v634 = vrot.slane %v625, %v633
        %v635 = vadd.s32 %v630, 4294967288
        %v636 = vlaneseq
        %v637 = vshrl.u32 %v636, 7
        %v638 = vsub.s32 %v635, %v637
        %v639 = vrot.slane %v628, %v638
        %vm640 = vcmask 130112
        %v641 = vsel %vm640, %v639, %v634
        %vm643 = vcmask 122880
        %644 = vst.msk [vmem:[%s424] sm:$0x1] %vm643, %v641
        %v645 = vld [vmem:[%s455] sm:$0x1]
        %v646 = vmax.f32 %v619, 0.0
        %v647 = vmax.f32 %v620, 0.0
        %v649 = vlaneseq
        %v650 = vshrl.u32 %v649, 7
        %v651 = vsub.s32 0, %v650
        %v652 = vrot.slane %v645, %v651
        %654 = vbcast.lane.b32.xlu0 %v652, 256
        %v655 = vpop.permute.xlu0 %654
        %s657 = sor.u32 256, 8
        %658 = vbcast.lane.b32.xlu0 %v652, %s657
        %v659 = vpop.permute.xlu0 %658
        %v662 = vmul.f32 %v619, %v655
        %v663 = vmul.f32 %v620, %v659
        %v664 = vsub.f32 %v646, %v662
        %v665 = vsub.f32 %v647, %v663
        %v666 = vand.u32 2147483647, %v619
        %v667 = vand.u32 2147483647, %v620
        %v668 = vsub.f32 0.0, %v666
        %v669 = vsub.f32 0.0, %v667
        %v670 = vmul.f32 %v668, 1.442695
        %v671 = vpow.pop %v670
        %v672 = vmul.f32 %v669, 1.442695
        %v673 = vpow.pop %v672
        %v674 = vadd.f32 %v671, 1.0
        %v675 = vadd.f32 %v673, 1.0
        %v676 = vlog2.pop %v674
        %v677 = vmul.f32 %v676, 0.6931472
        %v678 = vlog2.pop %v675
        %v679 = vmul.f32 %v678, 0.6931472
        %v680 = vadd.f32 %v664, %v677
        %v681 = vadd.f32 %v665, %v679
        %684 = vset.pattern.permute.xlu0 0
        %685 = vperm.xlu0 %684, %v680
        %v686 = vpop.permute.xlu0 %685
        %687 = vset.pattern.permute.xlu0 0
        %688 = vperm.xlu0 %687, %v681
        %v689 = vpop.permute.xlu0 %688
        %v690 = vlaneseq
        %v691 = vshrl.u32 %v690, 7
        %v692 = vsub.s32 %v630, %v691
        %v693 = vrot.slane %v686, %v692
        %v694 = vlaneseq
        %v695 = vshrl.u32 %v694, 7
        %v696 = vsub.s32 %v635, %v695
        %v697 = vrot.slane %v689, %v696
        %v698 = vsel %vm640, %v697, %v693
        %700 = vst.msk [vmem:[%s444] sm:$0x1] %vm643, %v698
        %s701 = sand.u32 %s187, 1
        %s702 = scalar_lea.sflag [#allocation4], %s701
        %s703 = sand.u32 %s187, 1
        %s704 = scalar_lea.vmem [#allocation8], %s703
        %s705 = sand.u32 %s33, 1
        %s706 = scalar_lea.sflag [#allocation10], %s705
        %s707 = sand.u32 %s215, 1
        %s708 = smul.addr %s707, 16
        %s709 = scalar_lea.vmem [#allocation9], %s708
        %s710 = sand.u32 %s33, 1
        %s711 = scalar_lea.sflag [#allocation10], %s710
        %s712 = sand.u32 %s243, 1
        %s713 = smul.addr %s712, 16
        %s714 = scalar_lea.vmem [#allocation11], %s713
        %s715 = sand.u32 %s271, 1
        %s716 = scalar_lea.sflag [#allocation13], %s715
        %s717 = sand.u32 %s271, 1
        %s718 = scalar_lea.vmem [#allocation12], %s717
        // Predicated region
        $region53: #{tpu_custom_call.1} parent=39 // pred_check
          %p719 = pneg %p197
        $region54: #{tpu_custom_call.1} parent=39 // pred_check_branch
          %721 = sbr.rel (%p719) target = $region56
        $region55: #{tpu_custom_call.1} parent=39 // pred_region
          %s723 = ssub.s32 16, 16
          %724 = vsyncadd %s702, %s723
          %s725 = sadd.s32 %s38, %s37
          %s726 = smul.addr %s725, 16
          %s727 = scalar_lea.hbm %s5, %s726
          %s729 = sshll.u32 %s704, 4
          %s730 = int_to_ptr.vmem [resolvable:$true] %s729
          %732 = dma.vmem_to_hbm [thread:$0]  %s730, 16, %s727, %s702
        $region56: #{tpu_custom_call.1} parent=39 // pred_fallthru
          _
        // Predicated region
        $region57: #{tpu_custom_call.1} parent=39 // pred_check
          %p733 = pneg %p225
        $region58: #{tpu_custom_call.1} parent=39 // pred_check_branch
          %735 = sbr.rel (%p733) target = $region60
        $region59: #{tpu_custom_call.1} parent=39 // pred_region
          %s736 = smul.u32 2, %s38
          %s738 = ssub.s32 256, 256
          %739 = vsyncadd %s706, %s738
          %s740 = smul.addr %s37, 2
          %s741 = sadd.s32 %s736, %s740
          %s742 = smul.addr %s741, 128
          %s743 = scalar_lea.hbm %s6, %s742
          %s744 = sshll.u32 %s709, 4
          %s745 = int_to_ptr.vmem [resolvable:$true] %s744
          %750 = dma.vmem_to_hbm [thread:$0]  %s745, 256, %s743, %s706, 128, 128, 8
        $region60: #{tpu_custom_call.1} parent=39 // pred_fallthru
          _
        // Predicated region
        $region61: #{tpu_custom_call.1} parent=39 // pred_check
          %p751 = pneg %p253
        $region62: #{tpu_custom_call.1} parent=39 // pred_check_branch
          %753 = sbr.rel (%p751) target = $region64
        $region63: #{tpu_custom_call.1} parent=39 // pred_region
          %s754 = smul.u32 2, %s38
          %s756 = ssub.s32 256, 256
          %757 = vsyncadd %s711, %s756
          %s758 = smul.addr %s37, 2
          %s759 = sadd.s32 %s754, %s758
          %s760 = smul.addr %s759, 128
          %s761 = scalar_lea.hbm %s7, %s760
          %s762 = sshll.u32 %s714, 4
          %s763 = int_to_ptr.vmem [resolvable:$true] %s762
          %768 = dma.vmem_to_hbm [thread:$0]  %s763, 256, %s761, %s711, 128, 128, 8
        $region64: #{tpu_custom_call.1} parent=39 // pred_fallthru
          _
        // Predicated region
        $region65: #{tpu_custom_call.1} parent=39 // pred_check
          %p769 = pneg %p281
        $region66: #{tpu_custom_call.1} parent=39 // pred_check_branch
          %771 = sbr.rel (%p769) target = $region68
        $region67: #{tpu_custom_call.1} parent=39 // pred_region
          %s773 = ssub.s32 16, 16
          %774 = vsyncadd %s716, %s773
          %s775 = sadd.s32 %s38, %s37
          %s776 = smul.addr %s775, 16
          %s777 = scalar_lea.hbm %s8, %s776
          %s779 = sshll.u32 %s718, 4
          %s780 = int_to_ptr.vmem [resolvable:$true] %s779
          %782 = dma.vmem_to_hbm [thread:$0]  %s780, 16, %s777, %s716
        $region68: #{tpu_custom_call.1} parent=39 // pred_fallthru
          _
      $region40: #{tpu_custom_call.1} parent=5 // pred_fallthru
        _
      %p783 = scmp.le.s32.totalorder 2, %s28
      // Predicated region
      $region69: #{tpu_custom_call.1} parent=5 // pred_check
        %p784 = pneg %p783
      $region70: #{tpu_custom_call.1} parent=5 // pred_check_branch
        %786 = sbr.rel (%p784) target = $region72
      $region71: #{tpu_custom_call.1} parent=5 // pred_region
        %s787 = ssub.s32 %s28, 2
        // Predicated region
        $region73: #{tpu_custom_call.1} parent=71 // pred_check
          %p788 = pneg %p203
        $region74: #{tpu_custom_call.1} parent=71 // pred_check_branch
          %790 = sbr.rel (%p788) target = $region76
        $region75: #{tpu_custom_call.1} parent=71 // pred_region
          %s791 = sand.u32 %s188, 1
          %s792 = scalar_lea.sflag [#allocation4], %s791
          %s793 = sand.u32 %s188, 1
          %s794 = scalar_lea.vmem [#allocation8], %s793
          %795 = dma.done %s792, 16
        $region76: #{tpu_custom_call.1} parent=71 // pred_fallthru
          _
        // Predicated region
        $region77: #{tpu_custom_call.1} parent=71 // pred_check
          %p796 = pneg %p231
        $region78: #{tpu_custom_call.1} parent=71 // pred_check_branch
          %798 = sbr.rel (%p796) target = $region80
        $region79: #{tpu_custom_call.1} parent=71 // pred_region
          %s799 = sand.u32 %s34, 1
          %s800 = scalar_lea.sflag [#allocation10], %s799
          %s801 = sand.u32 %s216, 1
          %s802 = smul.addr %s801, 16
          %s803 = scalar_lea.vmem [#allocation9], %s802
          %804 = dma.done %s800, 256
        $region80: #{tpu_custom_call.1} parent=71 // pred_fallthru
          _
        // Predicated region
        $region81: #{tpu_custom_call.1} parent=71 // pred_check
          %p805 = pneg %p259
        $region82: #{tpu_custom_call.1} parent=71 // pred_check_branch
          %807 = sbr.rel (%p805) target = $region84
        $region83: #{tpu_custom_call.1} parent=71 // pred_region
          %s808 = sand.u32 %s34, 1
          %s809 = scalar_lea.sflag [#allocation10], %s808
          %s810 = sand.u32 %s244, 1
          %s811 = smul.addr %s810, 16
          %s812 = scalar_lea.vmem [#allocation11], %s811
          %813 = dma.done %s809, 256
        $region84: #{tpu_custom_call.1} parent=71 // pred_fallthru
          _
        // Predicated region
        $region85: #{tpu_custom_call.1} parent=71 // pred_check
          %p814 = pneg %p287
        $region86: #{tpu_custom_call.1} parent=71 // pred_check_branch
          %816 = sbr.rel (%p814) target = $region88
        $region87: #{tpu_custom_call.1} parent=71 // pred_region
          %s817 = sand.u32 %s272, 1
          %s818 = scalar_lea.sflag [#allocation13], %s817
          %s819 = sand.u32 %s272, 1
          %s820 = scalar_lea.vmem [#allocation12], %s819
          %821 = dma.done %s818, 16
        $region88: #{tpu_custom_call.1} parent=71 // pred_fallthru
          _
      $region72: #{tpu_custom_call.1} parent=5 // pred_fallthru
        _
    $region6: #{tpu_custom_call.1} parent=1 // loop_footer
      %s32 = sadd.s32 1, %s28
    $region7: #{tpu_custom_call.1} parent=1 // loop_footer_branch
      %27 = sbr.rel target = $region3
    $region8: #{tpu_custom_call.1} parent=1 // loop_exit
      _
    %822 = vsyncpa [#allocation3], 1
    %s823 = scalar_lea.sflag [#allocation3], 1
    %824 = vsyncpa %s823, 1
    %825 = vsyncpa [#allocation6], 1
    %826 = vsyncpa [#allocation4], 1
    %s827 = scalar_lea.sflag [#allocation4], 1
    %828 = vsyncpa %s827, 1
    %829 = vsyncpa [#allocation10], 1
    %s830 = scalar_lea.sflag [#allocation10], 1
    %831 = vsyncpa %s830, 1
    %832 = vsyncpa [#allocation13], 1
    %s833 = scalar_lea.sflag [#allocation13], 1
    %834 = vsyncpa %s833, 1

</llo_original>
